<compile_context>
chip_gen: v7x
topology: tpu7x:2x2x1
jax: 0.10.0
libtpu: 0.0.40
codegen_flags: <defaults>
</compile_context>

<pallas_src>
import jax
import jax.numpy as jnp
from jax.experimental import pallas as pl
from jax.experimental.pallas import tpu as pltpu


def se_block_kernel(x_ref, w1_ref, b1_ref, w2_ref, b2_ref, o_ref):
    # x_ref: (TB, C, HW) block holding TB whole samples.
    x = x_ref[...]
    xf = x.astype(jnp.float32)                      # bf16-safe accumulation
    hw = x.shape[-1]                                # full H*W (never tiled)

    # Squeeze: global average pool over the (lane) spatial axis -> (TB, C).
    pooled = jnp.sum(xf, axis=-1) * (1.0 / hw)

    # Excitation MLP (runs once for all TB samples in this tile).
    h = jnp.dot(pooled, w1_ref[...],
                preferred_element_type=jnp.float32) + b1_ref[...]   # (TB, hid)
    h = jnp.where(h > 0, h, 0.1 * h)                                # LeakyReLU(0.1)
    z = jnp.dot(h, w2_ref[...],
                preferred_element_type=jnp.float32) + b2_ref[...]   # (TB, C)
    gate = pl.reciprocal(1.0 + jnp.exp(-z), approx=False)           # Sigmoid, (TB, C)

    # Scale: per-channel gate lane-broadcast over HW (no transposes).
    o_ref[...] = (xf * gate[:, :, None]).astype(o_ref.dtype)


def _pick_tile_batch(B, C, HW, itemsize):
    """Largest divisor of B such that 2 input + 2 output double-buffered
    tiles stay under ~32 MiB while keeping enough grid steps to hide DMA
    (>= 4 when possible) and feed both v7x TensorCores (>= 2)."""
    bytes_per_sample = C * HW * itemsize
    max_tile_bytes = 8 * 1024 * 1024            # 4 buffered tiles -> <= 32 MiB
    cap = max(1, max_tile_bytes // bytes_per_sample)
    if B >= 4:
        cap = min(cap, B // 4)
    elif B >= 2:
        cap = min(cap, B // 2)
    cap = max(1, min(cap, B))
    for d in range(cap, 0, -1):
        if B % d == 0:
            return d
    return 1


def se_block(x_nchw, w1, b1, w2, b2):
    """x_nchw: (B, C, H, W). Params: w1 (C,hid), b1 (1,hid), w2 (hid,C), b2 (1,C)."""
    B, C, H, W = x_nchw.shape
    HW = H * W
    hid = w1.shape[1]
    x3d = x_nchw.reshape(B, C, HW)

    itemsize = jnp.dtype(x_nchw.dtype).itemsize
    tb = _pick_tile_batch(B, C, HW, itemsize)
    grid_b = B // tb
    tile_bytes = tb * C * HW * itemsize
    # 2 in + 2 out double-buffered tiles + f32 temps + tiny weights.
    vmem_limit = int(min(max(48 * 2**20, 5 * tile_bytes), 112 * 2**20))

    # TODO(synk): for late SE stages with HW < 128, a channels-last (B,HW,C)
    # variant (pool over sublanes, lane-dense C stores) avoids masked vst;
    # and for single samples too big for v7x's 64 MiB VMEM, fall back to a
    # two-pass (pool+MLP, then scale) design.
    out = pl.pallas_call(
        se_block_kernel,
        out_shape=jax.ShapeDtypeStruct((B, C, HW), x_nchw.dtype),
        grid_spec=pltpu.PrefetchScalarGridSpec(
            num_scalar_prefetch=0,
            grid=(grid_b,),
            in_specs=[
                pl.BlockSpec((tb, C, HW), lambda b: (b, 0, 0)),
                pl.BlockSpec((C, hid), lambda b: (0, 0)),
                pl.BlockSpec((1, hid), lambda b: (0, 0)),
                pl.BlockSpec((hid, C), lambda b: (0, 0)),
                pl.BlockSpec((1, C), lambda b: (0, 0)),
            ],
            out_specs=pl.BlockSpec((tb, C, HW), lambda b: (b, 0, 0)),
        ),
        # Safe: each output tile is produced only from its own input tile,
        # which is fully read before the writeback. Caller may donate x.
        input_output_aliases={0: 0},
        compiler_params=pltpu.CompilerParams(
            dimension_semantics=("parallel",),
            vmem_limit_bytes=vmem_limit,
        ),
    )(x3d, w1, b1, w2, b2)

    return out.reshape(B, C, H, W)


def se_block_ref(x, w1, b1, w2, b2):
    """Pure-JAX reference mirroring the PyTorch forward."""
    y = jnp.mean(x, axis=(2, 3))                      # (B, C)
    h = y @ w1 + b1                                   # (B, hid)
    h = jnp.where(h > 0, h, 0.1 * h)                  # LeakyReLU(0.1)
    z = h @ w2 + b2                                   # (B, C)
    g = jax.nn.sigmoid(z)
    return x * g[:, :, None, None]


if __name__ == "__main__":
    # channel must be divisible by reduction (=16): channel=32 -> hidden=2.
    B, C, H, W = 2, 32, 16, 16
    reduction = 16
    hidden = C // reduction

    key = jax.random.PRNGKey(0)
    kx, k1, k2, k3, k4 = jax.random.split(key, 5)

    x = jax.random.normal(kx, (B, C, H, W), dtype=jnp.float32)
    w1 = jax.random.normal(k1, (C, hidden), dtype=jnp.float32) * 0.1
    b1 = jax.random.normal(k2, (1, hidden), dtype=jnp.float32) * 0.1
    w2 = jax.random.normal(k3, (hidden, C), dtype=jnp.float32) * 0.1
    b2 = jax.random.normal(k4, (1, C), dtype=jnp.float32) * 0.1

    out = jax.jit(se_block)(x, w1, b1, w2, b2)
    out = jax.block_until_ready(out)

    ref = se_block_ref(x, w1, b1[0], w2, b2[0])
    assert out.shape == (B, C, H, W)
    assert jnp.allclose(out, ref, atol=1e-5, rtol=1e-5), "mismatch vs reference"

    print("KERNEL_OK")
</pallas_src>

<mosaic_0001>
module attributes {stable_mosaic.version = 11 : i64} {
  func.func @se_block_kernel(%arg0: i32, %arg1: memref<1x32x256xf32, #tpu.memory_space<vmem>>, %arg2: memref<32x2xf32, #tpu.memory_space<vmem>>, %arg3: memref<1x2xf32, #tpu.memory_space<vmem>>, %arg4: memref<2x32xf32, #tpu.memory_space<vmem>>, %arg5: memref<1x32xf32, #tpu.memory_space<vmem>>, %arg6: memref<1x32x256xf32, #tpu.memory_space<vmem>>) attributes {dimension_semantics = [#tpu.dimension_semantics<parallel>], iteration_bounds = array<i64: 2>, scalar_prefetch = 0 : i64, scratch_operands = 0 : i64, tpu.core_type = #tpu.core_type<tc>, window_params = [{transform_indices = @transform_0, window_bounds = array<i64: 1, 32, 256>}, {pipeline_mode = #tpu.pipeline_mode<synchronous>, transform_indices = @transform_1, window_bounds = array<i64: 32, 2>}, {pipeline_mode = #tpu.pipeline_mode<synchronous>, transform_indices = @transform_2, window_bounds = array<i64: 1, 2>}, {pipeline_mode = #tpu.pipeline_mode<synchronous>, transform_indices = @transform_3, window_bounds = array<i64: 2, 32>}, {pipeline_mode = #tpu.pipeline_mode<synchronous>, transform_indices = @transform_4, window_bounds = array<i64: 1, 32>}, {transform_indices = @transform_5, window_bounds = array<i64: 1, 32, 256>}]} {
    %c0 = arith.constant 0 : index
    %c0_0 = arith.constant 0 : index
    %c0_1 = arith.constant 0 : index
    %0 = vector.load %arg1[%c0, %c0_0, %c0_1] : memref<1x32x256xf32, #tpu.memory_space<vmem>>, vector<1x32x256xf32>
    %cst = arith.constant dense<0.000000e+00> : vector<1x32xf32>
    %1 = vector.multi_reduction <add>, %0, %cst [2] : vector<1x32x256xf32> to vector<1x32xf32>
    %cst_2 = arith.constant 3.906250e-03 : f32
    %2 = vector.broadcast %cst_2 : f32 to vector<1x32xf32>
    %3 = arith.mulf %1, %2 : vector<1x32xf32>
    %c0_3 = arith.constant 0 : index
    %c0_4 = arith.constant 0 : index
    %4 = vector.load %arg2[%c0_3, %c0_4] : memref<32x2xf32, #tpu.memory_space<vmem>>, vector<32x2xf32>
    %cst_5 = arith.constant dense<0.000000e+00> : vector<1x2xf32>
    %5 = tpu.matmul %3, %4, %cst_5 {dimension_numbers = #tpu.dot_dimension_numbers<[1], [0], [0], [1], [0, 0, 1, 1], [], []>} : vector<1x32xf32>, vector<32x2xf32>, vector<1x2xf32> -> vector<1x2xf32>
    %c0_6 = arith.constant 0 : index
    %c0_7 = arith.constant 0 : index
    %6 = vector.load %arg3[%c0_6, %c0_7] : memref<1x2xf32, #tpu.memory_space<vmem>>, vector<1x2xf32>
    %7 = arith.addf %5, %6 : vector<1x2xf32>
    %cst_8 = arith.constant 0.000000e+00 : f32
    %8 = vector.broadcast %cst_8 : f32 to vector<1x2xf32>
    %9 = arith.cmpf ogt, %7, %8 : vector<1x2xf32>
    %cst_9 = arith.constant 1.000000e-01 : f32
    %10 = vector.broadcast %cst_9 : f32 to vector<1x2xf32>
    %11 = arith.mulf %10, %7 : vector<1x2xf32>
    %12 = arith.select %9, %7, %11 : vector<1x2xi1>, vector<1x2xf32>
    %c0_10 = arith.constant 0 : index
    %c0_11 = arith.constant 0 : index
    %13 = vector.load %arg4[%c0_10, %c0_11] : memref<2x32xf32, #tpu.memory_space<vmem>>, vector<2x32xf32>
    %cst_12 = arith.constant dense<0.000000e+00> : vector<1x32xf32>
    %14 = tpu.matmul %12, %13, %cst_12 {dimension_numbers = #tpu.dot_dimension_numbers<[1], [0], [0], [1], [0, 0, 1, 1], [], []>} : vector<1x2xf32>, vector<2x32xf32>, vector<1x32xf32> -> vector<1x32xf32>
    %c0_13 = arith.constant 0 : index
    %c0_14 = arith.constant 0 : index
    %15 = vector.load %arg5[%c0_13, %c0_14] : memref<1x32xf32, #tpu.memory_space<vmem>>, vector<1x32xf32>
    %16 = arith.addf %14, %15 : vector<1x32xf32>
    %cst_15 = arith.constant 0.000000e+00 : f32
    %17 = vector.broadcast %cst_15 : f32 to vector<1x32xf32>
    %18 = arith.subf %17, %16 : vector<1x32xf32>
    %19 = math.exp %18 : vector<1x32xf32>
    %cst_16 = arith.constant 1.000000e+00 : f32
    %20 = vector.broadcast %cst_16 : f32 to vector<1x32xf32>
    %21 = arith.addf %20, %19 : vector<1x32xf32>
    %22 = tpu.reciprocal %21 : vector<1x32xf32> -> vector<1x32xf32>
    %23 = vector.shape_cast %22 : vector<1x32xf32> to vector<1x32x1xf32>
    %24 = vector.broadcast %23 : vector<1x32x1xf32> to vector<1x32x256xf32>
    %25 = arith.mulf %0, %24 : vector<1x32x256xf32>
    %c0_17 = arith.constant 0 : index
    %c0_18 = arith.constant 0 : index
    %c0_19 = arith.constant 0 : index
    %26 = vector.load %arg6[%c0_17, %c0_18, %c0_19] : memref<1x32x256xf32, #tpu.memory_space<vmem>>, vector<1x32x256xf32>
    tpu.vector_store %arg6[%c0_17, %c0_18, %c0_19], %25 {strides = array<i32>} : memref<1x32x256xf32, #tpu.memory_space<vmem>>, vector<1x32x256xf32>,
    return
  }
  func.func @transform_0(%arg0: i32) -> (i32, i32, i32) {
    %c0_i32 = arith.constant 0 : i32
    %c0_i32_0 = arith.constant 0 : i32
    %c0_i32_1 = arith.constant 0 : i32
    return %arg0, %c0_i32, %c0_i32_0 : i32, i32, i32
  }
  func.func @transform_1(%arg0: i32) -> (i32, i32) {
    %c0_i32 = arith.constant 0 : i32
    %c0_i32_0 = arith.constant 0 : i32
    %c0_i32_1 = arith.constant 0 : i32
    return %c0_i32, %c0_i32_0 : i32, i32
  }
  func.func @transform_2(%arg0: i32) -> (i32, i32) {
    %c0_i32 = arith.constant 0 : i32
    %c0_i32_0 = arith.constant 0 : i32
    %c0_i32_1 = arith.constant 0 : i32
    return %c0_i32, %c0_i32_0 : i32, i32
  }
  func.func @transform_3(%arg0: i32) -> (i32, i32) {
    %c0_i32 = arith.constant 0 : i32
    %c0_i32_0 = arith.constant 0 : i32
    %c0_i32_1 = arith.constant 0 : i32
    return %c0_i32, %c0_i32_0 : i32, i32
  }
  func.func @transform_4(%arg0: i32) -> (i32, i32) {
    %c0_i32 = arith.constant 0 : i32
    %c0_i32_0 = arith.constant 0 : i32
    %c0_i32_1 = arith.constant 0 : i32
    return %c0_i32, %c0_i32_0 : i32, i32
  }
  func.func @transform_5(%arg0: i32) -> (i32, i32, i32) {
    %c0_i32 = arith.constant 0 : i32
    %c0_i32_0 = arith.constant 0 : i32
    %c0_i32_1 = arith.constant 0 : i32
    return %arg0, %c0_i32, %c0_i32_0 : i32, i32, i32
  }
}

</mosaic_0001>

<llo_original>
// kernel: se_block.1
$region0: #{se_block.1}
  #allocation0 [shape = 'u32[]', space=smem, size = 0x4, offset = 0x4, fixed_abs, tag = 'smem constant byte address 0x4 - core index']
  #allocation1 [shape = 'u32[144,128]{1,0:T(1,128)}', space=vmem, size = 0x12000, scoped, tag = 'internal scratch']
  %s0 = inlined_call_operand.vmem [shape: f32[2,32,256], index: 0, kind: input, shape index: {}, may-alias: {0,5}]
  %s1 = inlined_call_operand.vmem [shape: f32[32,2], index: 1, kind: input, shape index: {}]
  %s2 = inlined_call_operand.vmem [shape: f32[1,2], index: 2, kind: input, shape index: {}]
  %s3 = inlined_call_operand.vmem [shape: f32[2,32], index: 3, kind: input, shape index: {}]
  %s4 = inlined_call_operand.vmem [shape: f32[1,32], index: 4, kind: input, shape index: {}]
  %s5 = inlined_call_operand.vmem [shape: f32[2,32,256], index: 5, kind: output, shape index: {}, may-alias: {0,5}]
  %s6 = sld [smem:[#allocation0]]
  $region53: #{se_block.1} parent=0
    _
  %s8 = ssub.s32 1, %s6
  %s9 = scalar_select 0, %s8, %s6
  loop: start=0, step=1, limit=4
  $region2: #{se_block.1} parent=0 // loop_pre_header
    _
  $region3: #{se_block.1} parent=0 // loop_header
    %s11 = sphi 0, %s15
    %p12 = scmp.ge.s32.totalorder %s11, 4
    %s21 = sphi 0, %s23
    %s24 = sphi 0, %s21
    %s25 = sphi 0, %s24
    %s41 = sphi 0, %s25
    %s45 = sphi 0, %s45
    %s47 = sphi 0, %s45
    %s48 = sphi 0, %s47
    %s62 = sphi 0, %s48
    %s66 = sphi 0, %s66
    %s68 = sphi 0, %s66
    %s69 = sphi 0, %s68
    %s83 = sphi 0, %s69
    %s87 = sphi 0, %s87
    %s89 = sphi 0, %s87
    %s90 = sphi 0, %s89
    %s104 = sphi 0, %s90
    %s108 = sphi 0, %s108
    %s110 = sphi 0, %s108
    %s111 = sphi 0, %s110
    %s125 = sphi 0, %s111
    %s131 = sphi 0, %s133
    %s134 = sphi 0, %s131
    %s135 = sphi 0, %s134
    %s151 = sphi 0, %s135
  $region4: #{se_block.1} parent=0 // loop_header_branch
    %14 = sbr.rel (%p12) target = $region8
  $region5: #{se_block.1} parent=0 // loop_body
    %s16 = ssub.s32 %s11, 1
    %s17 = ssub.s32 %s11, 2
    %s18 = sadd.s32 %s11, 1
    %s19 = ssub.s32 %s11, %s18
    %p20 = scmp.eq.s32.totalorder %s19, 0
    %s22 = sadd.s32 %s21, 1
    %s23 = scalar_select %p20, %s21, %s22
    %p26 = pneg %p20
    %p27 = scmp.eq.s32.totalorder %s11, 1
    %p28 = por %p26, %p27
    %p29 = scmp.ne.s32.totalorder %s21, %s24
    %p30 = scmp.eq.s32.totalorder %s11, 0
    %p31 = por %p29, %p30
    %p32 = scmp.ne.s32.totalorder %s21, %s24
    %p33 = scmp.eq.s32.totalorder %s16, 1
    %p34 = por %p32, %p33
    %p35 = scmp.ne.s32.totalorder %s24, %s25
    %p36 = scmp.eq.s32.totalorder %s16, 0
    %p37 = por %p35, %p36
    %p38 = scmp.ne.s32.totalorder %s24, %s25
    %p39 = scmp.eq.s32.totalorder %s17, 1
    %p40 = por %p38, %p39
    %p42 = scmp.ne.s32.totalorder %s25, %s41
    %p43 = scmp.eq.s32.totalorder %s17, 0
    %p44 = por %p42, %p43
    %s46 = sadd.s32 %s45, 1
    %p49 = scmp.eq.s32.totalorder %s11, 1
    %p50 = scmp.ne.s32.totalorder %s45, %s47
    %p51 = scmp.eq.s32.totalorder %s11, 0
    %p52 = por %p50, %p51
    %p53 = scmp.ne.s32.totalorder %s45, %s47
    %p54 = scmp.eq.s32.totalorder %s16, 1
    %p55 = por %p53, %p54
    %p56 = scmp.ne.s32.totalorder %s47, %s48
    %p57 = scmp.eq.s32.totalorder %s16, 0
    %p58 = por %p56, %p57
    %p59 = scmp.ne.s32.totalorder %s47, %s48
    %p60 = scmp.eq.s32.totalorder %s17, 1
    %p61 = por %p59, %p60
    %p63 = scmp.ne.s32.totalorder %s48, %s62
    %p64 = scmp.eq.s32.totalorder %s17, 0
    %p65 = por %p63, %p64
    %s67 = sadd.s32 %s66, 1
    %p70 = scmp.eq.s32.totalorder %s11, 1
    %p71 = scmp.ne.s32.totalorder %s66, %s68
    %p72 = scmp.eq.s32.totalorder %s11, 0
    %p73 = por %p71, %p72
    %p74 = scmp.ne.s32.totalorder %s66, %s68
    %p75 = scmp.eq.s32.totalorder %s16, 1
    %p76 = por %p74, %p75
    %p77 = scmp.ne.s32.totalorder %s68, %s69
    %p78 = scmp.eq.s32.totalorder %s16, 0
    %p79 = por %p77, %p78
    %p80 = scmp.ne.s32.totalorder %s68, %s69
    %p81 = scmp.eq.s32.totalorder %s17, 1
    %p82 = por %p80, %p81
    %p84 = scmp.ne.s32.totalorder %s69, %s83
    %p85 = scmp.eq.s32.totalorder %s17, 0
    %p86 = por %p84, %p85
    %s88 = sadd.s32 %s87, 1
    %p91 = scmp.eq.s32.totalorder %s11, 1
    %p92 = scmp.ne.s32.totalorder %s87, %s89
    %p93 = scmp.eq.s32.totalorder %s11, 0
    %p94 = por %p92, %p93
    %p95 = scmp.ne.s32.totalorder %s87, %s89
    %p96 = scmp.eq.s32.totalorder %s16, 1
    %p97 = por %p95, %p96
    %p98 = scmp.ne.s32.totalorder %s89, %s90
    %p99 = scmp.eq.s32.totalorder %s16, 0
    %p100 = por %p98, %p99
    %p101 = scmp.ne.s32.totalorder %s89, %s90
    %p102 = scmp.eq.s32.totalorder %s17, 1
    %p103 = por %p101, %p102
    %p105 = scmp.ne.s32.totalorder %s90, %s104
    %p106 = scmp.eq.s32.totalorder %s17, 0
    %p107 = por %p105, %p106
    %s109 = sadd.s32 %s108, 1
    %p112 = scmp.eq.s32.totalorder %s11, 1
    %p113 = scmp.ne.s32.totalorder %s108, %s110
    %p114 = scmp.eq.s32.totalorder %s11, 0
    %p115 = por %p113, %p114
    %p116 = scmp.ne.s32.totalorder %s108, %s110
    %p117 = scmp.eq.s32.totalorder %s16, 1
    %p118 = por %p116, %p117
    %p119 = scmp.ne.s32.totalorder %s110, %s111
    %p120 = scmp.eq.s32.totalorder %s16, 0
    %p121 = por %p119, %p120
    %p122 = scmp.ne.s32.totalorder %s110, %s111
    %p123 = scmp.eq.s32.totalorder %s17, 1
    %p124 = por %p122, %p123
    %p126 = scmp.ne.s32.totalorder %s111, %s125
    %p127 = scmp.eq.s32.totalorder %s17, 0
    %p128 = por %p126, %p127
    %s129 = ssub.s32 %s11, %s18
    %p130 = scmp.eq.s32.totalorder %s129, 0
    %s132 = sadd.s32 %s131, 1
    %s133 = scalar_select %p130, %s131, %s132
    %p136 = pneg %p130
    %p137 = scmp.eq.s32.totalorder %s11, 1
    %p138 = por %p136, %p137
    %p139 = scmp.ne.s32.totalorder %s131, %s134
    %p140 = scmp.eq.s32.totalorder %s11, 0
    %p141 = por %p139, %p140
    %p142 = scmp.ne.s32.totalorder %s131, %s134
    %p143 = scmp.eq.s32.totalorder %s16, 1
    %p144 = por %p142, %p143
    %p145 = scmp.ne.s32.totalorder %s134, %s135
    %p146 = scmp.eq.s32.totalorder %s16, 0
    %p147 = por %p145, %p146
    %p148 = scmp.ne.s32.totalorder %s134, %s135
    %p149 = scmp.eq.s32.totalorder %s17, 1
    %p150 = por %p148, %p149
    %p152 = scmp.ne.s32.totalorder %s135, %s151
    %p153 = scmp.eq.s32.totalorder %s17, 0
    %p154 = por %p152, %p153
    %p155 = scmp.le.s32.totalorder 1, %s11
    %p156 = scmp.lt.s32.totalorder %s11, 3
    %p157 = pnand %p155, %p156
    %p158 = pneg %p157
    // Predicated region
    $region9: #{se_block.1} parent=5 // pred_check
      _
    $region10: #{se_block.1} parent=5 // pred_check_branch
      %160 = sbr.rel (%p157) target = $region12
    $region11: #{se_block.1} parent=5 // pred_region
      %s161 = ssub.s32 %s11, 1
      // Predicated region
      $region13: #{se_block.1} parent=11 // pred_check
        %p162 = pneg %p58
      $region14: #{se_block.1} parent=11 // pred_check_branch
        %164 = sbr.rel (%p162) target = $region16
      $region15: #{se_block.1} parent=11 // pred_region
        _
      $region16: #{se_block.1} parent=11 // pred_fallthru
        _
      // Predicated region
      $region17: #{se_block.1} parent=11 // pred_check
        %p165 = pneg %p79
      $region18: #{se_block.1} parent=11 // pred_check_branch
        %167 = sbr.rel (%p165) target = $region20
      $region19: #{se_block.1} parent=11 // pred_region
        _
      $region20: #{se_block.1} parent=11 // pred_fallthru
        _
      // Predicated region
      $region21: #{se_block.1} parent=11 // pred_check
        %p168 = pneg %p100
      $region22: #{se_block.1} parent=11 // pred_check_branch
        %170 = sbr.rel (%p168) target = $region24
      $region23: #{se_block.1} parent=11 // pred_region
        _
      $region24: #{se_block.1} parent=11 // pred_fallthru
        _
      // Predicated region
      $region25: #{se_block.1} parent=11 // pred_check
        %p171 = pneg %p121
      $region26: #{se_block.1} parent=11 // pred_check_branch
        %173 = sbr.rel (%p171) target = $region28
      $region27: #{se_block.1} parent=11 // pred_region
        _
      $region28: #{se_block.1} parent=11 // pred_fallthru
        _
    $region12: #{se_block.1} parent=5 // pred_fallthru
      _
    %p174 = scmp.lt.s32.totalorder %s11, 2
    // Predicated region
    $region29: #{se_block.1} parent=5 // pred_check
      %p175 = pneg %p174
    $region30: #{se_block.1} parent=5 // pred_check_branch
      %177 = sbr.rel (%p175) target = $region32
    $region31: #{se_block.1} parent=5 // pred_region
      // Predicated region
      $region33: #{se_block.1} parent=31 // pred_check
        %p178 = pneg %p31
      $region34: #{se_block.1} parent=31 // pred_check_branch
        %180 = sbr.rel (%p178) target = $region36
      $region35: #{se_block.1} parent=31 // pred_region
        %p181 = scmp.lt.s32.totalorder %s11, 1
        %s182 = scalar_select %p181, %s11, 1
        %s183 = smul.addr %s182, 8
        %s184 = smul.addr %s183, 8
        %s185 = scalar_lea.vmem %s0, %s184
      $region36: #{se_block.1} parent=31 // pred_fallthru
        _
    $region32: #{se_block.1} parent=5 // pred_fallthru
      _
    %p186 = scmp.le.s32.totalorder 1, %s11
    %p187 = scmp.lt.s32.totalorder %s11, 3
    %p188 = pnand %p186, %p187
    %p189 = pneg %p188
    // Predicated region
    $region37: #{se_block.1} parent=5 // pred_check
      _
    $region38: #{se_block.1} parent=5 // pred_check_branch
      %191 = sbr.rel (%p188) target = $region40
    $region39: #{se_block.1} parent=5 // pred_region
      %s192 = ssub.s32 %s11, 1
      %p193 = scmp.lt.s32.totalorder %s16, 1
      %s194 = scalar_select %p193, %s16, 1
      %s195 = smul.addr %s194, 8
      %s196 = smul.addr %s195, 8
      %s197 = scalar_lea.vmem %s0, %s196
      %p198 = pneg %p37
      %p199 = pneg %p34
      %p200 = pneg %p58
      %p201 = pneg %p55
      %p202 = pneg %p79
      %p203 = pneg %p76
      %p204 = pneg %p100
      %p205 = pneg %p97
      %p206 = pneg %p121
      %p207 = pneg %p118
      %p208 = pneg %p147
      %p209 = pneg %p144
      %p210 = scmp.lt.s32.totalorder %s16, 1
      %s211 = scalar_select %p210, %s16, 1
      %s212 = smul.addr %s211, 8
      %s213 = smul.addr %s212, 8
      %s214 = scalar_lea.vmem %s5, %s213
      %p215 = scmp.lt.s32.totalorder %s16, 1
      %s216 = scalar_select %p215, %s16, 1
      %s217 = smul.addr %s216, 8
      %s218 = smul.addr %s217, 8
      %s219 = scalar_lea.vmem %s0, %s218
      %p220 = scmp.lt.s32.totalorder %s16, 1
      %s221 = scalar_select %p220, %s16, 1
      %s222 = smul.addr %s221, 8
      %s223 = smul.addr %s222, 8
      %s224 = scalar_lea.vmem %s5, %s223
      %v225 = vld [vmem:[%s219] sm:$0xff]
      %v226 = vld [vmem:[%s219 + $0x8] sm:$0xff]
      %v227 = vld [vmem:[%s219 + $0x10] sm:$0xff]
      %v228 = vld [vmem:[%s219 + $0x18] sm:$0xff]
      %v229 = vld [vmem:[%s219 + $0x20] sm:$0xff]
      %v230 = vld [vmem:[%s219 + $0x28] sm:$0xff]
      %v231 = vld [vmem:[%s219 + $0x30] sm:$0xff]
      %v232 = vld [vmem:[%s219 + $0x38] sm:$0xff]
      %v233 = vadd.f32 %v225, %v226
      %234 = vadd.xlane.f32.xlu0 %v233
      %v235 = vpop.xlane.xlu0 %234
      %v236 = vadd.f32 %v227, %v228
      %237 = vadd.xlane.f32.xlu0 %v236
      %v238 = vpop.xlane.xlu0 %237
      %v239 = vadd.f32 %v229, %v230
      %240 = vadd.xlane.f32.xlu0 %v239
      %v241 = vpop.xlane.xlu0 %240
      %v242 = vadd.f32 %v231, %v232
      %243 = vadd.xlane.f32.xlu0 %v242
      %v244 = vpop.xlane.xlu0 %243
      %v245 = vmul.f32 %v235, 0.00390625
      %v246 = vmul.f32 %v238, 0.00390625
      %v247 = vmul.f32 %v241, 0.00390625
      %v248 = vmul.f32 %v244, 0.00390625
      %v249 = vld [vmem:[%s1] sm:$0xff]
      %v250 = vld [vmem:[%s1 + $0x8] sm:$0xff]
      %v251 = vld [vmem:[%s1 + $0x10] sm:$0xff]
      %v252 = vld [vmem:[%s1 + $0x18] sm:$0xff]
      %v253 = vld [vmem:[%s2] sm:$0x1]
      %v258 = vlaneseq
      %v259 = vand.u32 %v258, 127
      %v260 = vlaneseq
      %v261 = vshrl.u32 %v260, 7
      %v262 = vsub.s32 %v259, %v261
      %v263 = vrot.slane %v245, %v262
      %v264 = vadd.s32 %v259, 4294967288
      %v265 = vlaneseq
      %v266 = vshrl.u32 %v265, 7
      %v267 = vsub.s32 %v264, %v266
      %v268 = vrot.slane %v246, %v267
      %vm269 = vcmask 130112
      %v270 = vsel %vm269, %v268, %v263
      %v271 = vadd.s32 %v259, 4294967280
      %v272 = vlaneseq
      %v273 = vshrl.u32 %v272, 7
      %v274 = vsub.s32 %v271, %v273
      %v275 = vrot.slane %v247, %v274
      %vm276 = vcmask 195712
      %v277 = vsel %vm276, %v275, %v270
      %v278 = vadd.s32 %v259, 4294967272
      %v279 = vlaneseq
      %v280 = vshrl.u32 %v279, 7
      %v281 = vsub.s32 %v278, %v280
      %v282 = vrot.slane %v248, %v281
      %vm283 = vcmask 261312
      %v284 = vsel %vm283, %v282, %v277
      %vm285 = vcmask 261120
      %v286 = vsel %vm285, %v284, 0
      %288 = vmatprep.subr.mxu0 0.0
      %289 = vmatpush1.msra.mxu0 %v249
      %290 = vmatprep.subr.mxu0 0.0
      %291 = vmatpush1.msra.mxu0 %v250
      %292 = vmatprep.subr.mxu0 0.0
      %293 = vmatpush1.msra.mxu0 %v251
      %294 = vmatprep.subr.mxu0 0.0
      %295 = vmatpush1.msra.mxu0 %v252
      %296 = vmatprep.subr.mxu0 0.0
      %297 = vmatpush1.msra.mxu0 0.0
      %298 = vmatprep.subr.mxu0 0.0
      %299 = vmatpush1.msra.mxu0 0.0
      %300 = vmatprep.subr.mxu0 0.0
      %301 = vmatpush1.msra.mxu0 0.0
      %302 = vmatprep.subr.mxu0 0.0
      %303 = vmatpush1.msra.mxu0 0.0
      %304 = vmatprep.subr.mxu0 0.0
      %305 = vmatpush1.msra.mxu0 0.0
      %306 = vmatprep.subr.mxu0 0.0
      %307 = vmatpush1.msra.mxu0 0.0
      %308 = vmatprep.subr.mxu0 0.0
      %309 = vmatpush1.msra.mxu0 0.0
      %310 = vmatprep.subr.mxu0 0.0
      %311 = vmatpush1.msra.mxu0 0.0
      %312 = vmatprep.subr.mxu0 0.0
      %313 = vmatpush1.msra.mxu0 0.0
      %314 = vmatprep.subr.mxu0 0.0
      %315 = vmatpush1.msra.mxu0 0.0
      %316 = vmatprep.subr.mxu0 0.0
      %317 = vmatpush1.msra.mxu0 0.0
      %318 = vmatprep.subr.mxu0 0.0
      %319 = vmatpush1.msra.mxu0 0.0
      %320 = vmatprep.subr.mxu0 0.0
      %321 = vmatpush1.msra.mxu0 0.0
      %322 = vmatprep.subr.mxu0 0.0
      %323 = vmatpush1.msra.mxu0 0.0
      %324 = vmatprep.subr.mxu0 0.0
      %325 = vmatpush1.msra.mxu0 0.0
      %326 = vmatprep.subr.mxu0 0.0
      %327 = vmatpush1.msra.mxu0 0.0
      %328 = vmatprep.subr.mxu0 0.0
      %329 = vmatpush1.msra.mxu0 0.0
      %330 = vmatprep.subr.mxu0 0.0
      %331 = vmatpush1.msra.mxu0 0.0
      %332 = vmatprep.subr.mxu0 0.0
      %333 = vmatpush1.msra.mxu0 0.0
      %334 = vmatprep.subr.mxu0 0.0
      %335 = vmatpush1.msra.mxu0 0.0
      %336 = vmatprep.subr.mxu0 0.0
      %337 = vmatpush1.msra.mxu0 0.0
      %338 = vmatprep.subr.mxu0 0.0
      %339 = vmatpush1.msra.mxu0 0.0
      %340 = vmatprep.subr.mxu0 0.0
      %341 = vmatpush1.msra.mxu0 0.0
      %342 = vmatprep.subr.mxu0 0.0
      %343 = vmatpush1.msra.mxu0 0.0
      %344 = vmatprep.subr.mxu0 0.0
      %345 = vmatpush1.msra.mxu0 0.0
      %346 = vmatprep.subr.mxu0 0.0
      %347 = vmatpush1.msra.mxu0 0.0
      %348 = vmatprep.subr.mxu0 0.0
      %349 = vmatpush1.msra.mxu0 0.0
      %350 = vmatprep.subr.mxu0 0.0
      %351 = vmatpush1.msra.mxu0 0.0
      %352 = vmatprep.mubr.f32.mxu0 0.0
      %353 = vmatmul.mubr.f32.gmra.mrb[0].mxu0 %v286
      %v354 = vpop.f32.mrb[0].mxu0
      %v355 = vadd.f32 %v253, %v354
      %v356 = vpop.f32.mrb[0].mxu0
      %357 = vdwg.mxu0
      %vm358 = vcmp.gt.f32.partialorder %v355, 0.0
      %v359 = vmul.f32 %v355, 0.1
      %v360 = vsel %vm358, %v355, %v359
      %v361 = vld [vmem:[%s3] sm:$0x3]
      %v362 = vld [vmem:[%s4] sm:$0x1]
      %vm363 = vcmask 15360
      %v365 = vsel %vm363, %v360, 0
      %vm367 = vcmask 1041408
      %v369 = vsel %vm367, %v361, 0
      %371 = vmatprep.subr.mxu0 0.0
      %372 = vmatpush1.msra.mxu0 %v369
      %373 = vmatprep.subr.mxu0 0.0
      %374 = vmatpush1.msra.mxu0 0.0
      %375 = vmatprep.subr.mxu0 0.0
      %376 = vmatpush1.msra.mxu0 0.0
      %377 = vmatprep.subr.mxu0 0.0
      %378 = vmatpush1.msra.mxu0 0.0
      %379 = vmatprep.subr.mxu0 0.0
      %380 = vmatpush1.msra.mxu0 0.0
      %381 = vmatprep.subr.mxu0 0.0
      %382 = vmatpush1.msra.mxu0 0.0
      %383 = vmatprep.subr.mxu0 0.0
      %384 = vmatpush1.msra.mxu0 0.0
      %385 = vmatprep.subr.mxu0 0.0
      %386 = vmatpush1.msra.mxu0 0.0
      %387 = vmatprep.subr.mxu0 0.0
      %388 = vmatpush1.msra.mxu0 0.0
      %389 = vmatprep.subr.mxu0 0.0
      %390 = vmatpush1.msra.mxu0 0.0
      %391 = vmatprep.subr.mxu0 0.0
      %392 = vmatpush1.msra.mxu0 0.0
      %393 = vmatprep.subr.mxu0 0.0
      %394 = vmatpush1.msra.mxu0 0.0
      %395 = vmatprep.subr.mxu0 0.0
      %396 = vmatpush1.msra.mxu0 0.0
      %397 = vmatprep.subr.mxu0 0.0
      %398 = vmatpush1.msra.mxu0 0.0
      %399 = vmatprep.subr.mxu0 0.0
      %400 = vmatpush1.msra.mxu0 0.0
      %401 = vmatprep.subr.mxu0 0.0
      %402 = vmatpush1.msra.mxu0 0.0
      %403 = vmatprep.subr.mxu0 0.0
      %404 = vmatpush1.msra.mxu0 0.0
      %405 = vmatprep.subr.mxu0 0.0
      %406 = vmatpush1.msra.mxu0 0.0
      %407 = vmatprep.subr.mxu0 0.0
      %408 = vmatpush1.msra.mxu0 0.0
      %409 = vmatprep.subr.mxu0 0.0
      %410 = vmatpush1.msra.mxu0 0.0
      %411 = vmatprep.subr.mxu0 0.0
      %412 = vmatpush1.msra.mxu0 0.0
      %413 = vmatprep.subr.mxu0 0.0
      %414 = vmatpush1.msra.mxu0 0.0
      %415 = vmatprep.subr.mxu0 0.0
      %416 = vmatpush1.msra.mxu0 0.0
      %417 = vmatprep.subr.mxu0 0.0
      %418 = vmatpush1.msra.mxu0 0.0
      %419 = vmatprep.subr.mxu0 0.0
      %420 = vmatpush1.msra.mxu0 0.0
      %421 = vmatprep.subr.mxu0 0.0
      %422 = vmatpush1.msra.mxu0 0.0
      %423 = vmatprep.subr.mxu0 0.0
      %424 = vmatpush1.msra.mxu0 0.0
      %425 = vmatprep.subr.mxu0 0.0
      %426 = vmatpush1.msra.mxu0 0.0
      %427 = vmatprep.subr.mxu0 0.0
      %428 = vmatpush1.msra.mxu0 0.0
      %429 = vmatprep.subr.mxu0 0.0
      %430 = vmatpush1.msra.mxu0 0.0
      %431 = vmatprep.subr.mxu0 0.0
      %432 = vmatpush1.msra.mxu0 0.0
      %433 = vmatprep.subr.mxu0 0.0
      %434 = vmatpush1.msra.mxu0 0.0
      %435 = vmatprep.mubr.f32.mxu0 0.0
      %436 = vmatmul.mubr.f32.gmra.mrb[0].mxu0 %v365
      %v437 = vpop.f32.mrb[0].mxu0
      %v438 = vadd.f32 %v362, %v437
      %v439 = vpop.f32.mrb[0].mxu0
      %440 = vdwg.mxu0
      %v441 = vsub.f32 0.0, %v438
      %v442 = vmul.f32 %v441, 1.442695
      %v443 = vpow.pop %v442
      %v444 = vadd.f32 %v443, 1.0
      %v445 = vrcp.pop %v444
      %v446 = vlaneseq
      %v447 = vshrl.u32 %v446, 7
      %v448 = vsub.s32 0, %v447
      %v449 = vrot.slane %v445, %v448
      %451 = vbcast.lane.b32.xlu0 %v449, 256
      %v452 = vpop.permute.xlu0 %451
      %s454 = sor.u32 256, 8
      %455 = vbcast.lane.b32.xlu0 %v449, %s454
      %v456 = vpop.permute.xlu0 %455
      %s458 = sor.u32 256, 16
      %459 = vbcast.lane.b32.xlu0 %v449, %s458
      %v460 = vpop.permute.xlu0 %459
      %s462 = sor.u32 256, 24
      %463 = vbcast.lane.b32.xlu0 %v449, %s462
      %v464 = vpop.permute.xlu0 %463
      %v465 = vmul.f32 %v225, %v452
      %v466 = vmul.f32 %v226, %v452
      %v467 = vmul.f32 %v227, %v456
      %v468 = vmul.f32 %v228, %v456
      %v469 = vmul.f32 %v229, %v460
      %v470 = vmul.f32 %v230, %v460
      %v471 = vmul.f32 %v231, %v464
      %v472 = vmul.f32 %v232, %v464
      %473 = vst [vmem:[%s224] sm:$0xff] %v465
      %474 = vst [vmem:[%s224 + $0x8] sm:$0xff] %v466
      %475 = vst [vmem:[%s224 + $0x10] sm:$0xff] %v467
      %476 = vst [vmem:[%s224 + $0x18] sm:$0xff] %v468
      %477 = vst [vmem:[%s224 + $0x20] sm:$0xff] %v469
      %478 = vst [vmem:[%s224 + $0x28] sm:$0xff] %v470
      %479 = vst [vmem:[%s224 + $0x30] sm:$0xff] %v471
      %480 = vst [vmem:[%s224 + $0x38] sm:$0xff] %v472
      %p481 = scmp.lt.s32.totalorder %s16, 1
      %s482 = scalar_select %p481, %s16, 1
      %s483 = smul.addr %s482, 8
      %s484 = smul.addr %s483, 8
      %s485 = scalar_lea.vmem %s5, %s484
      // Predicated region
      $region41: #{se_block.1} parent=39 // pred_check
        %p486 = pneg %p144
      $region42: #{se_block.1} parent=39 // pred_check_branch
        %488 = sbr.rel (%p486) target = $region44
      $region43: #{se_block.1} parent=39 // pred_region
        _
      $region44: #{se_block.1} parent=39 // pred_fallthru
        _
    $region40: #{se_block.1} parent=5 // pred_fallthru
      _
    %p489 = scmp.le.s32.totalorder 2, %s11
    // Predicated region
    $region45: #{se_block.1} parent=5 // pred_check
      %p490 = pneg %p489
    $region46: #{se_block.1} parent=5 // pred_check_branch
      %492 = sbr.rel (%p490) target = $region48
    $region47: #{se_block.1} parent=5 // pred_region
      %s493 = ssub.s32 %s11, 2
      // Predicated region
      $region49: #{se_block.1} parent=47 // pred_check
        %p494 = pneg %p150
      $region50: #{se_block.1} parent=47 // pred_check_branch
        %496 = sbr.rel (%p494) target = $region52
      $region51: #{se_block.1} parent=47 // pred_region
        %p497 = scmp.lt.s32.totalorder %s17, 1
        %s498 = scalar_select %p497, %s17, 1
        %s499 = smul.addr %s498, 8
        %s500 = smul.addr %s499, 8
        %s501 = scalar_lea.vmem %s5, %s500
      $region52: #{se_block.1} parent=47 // pred_fallthru
        _
    $region48: #{se_block.1} parent=5 // pred_fallthru
      _
  $region6: #{se_block.1} parent=0 // loop_footer
    %s15 = sadd.s32 1, %s11
  $region7: #{se_block.1} parent=0 // loop_footer_branch
    %10 = sbr.rel target = $region3
  $region8: #{se_block.1} parent=0 // loop_exit
    _

</llo_original>
